<compile_context>
chip_gen: v7x
topology: tpu7x:2x2x1
jax: 0.10.0
libtpu: 0.0.40
codegen_flags: <defaults>
</compile_context>

<pallas_src>
import functools

import jax
import jax.numpy as jnp
from jax import lax
from jax.experimental import pallas as pl
from jax.experimental.pallas import tpu as pltpu


# ----------------------------------------------------------------------------
# Stand-in feature extractor (first ConvBnReLU block of vxm SingleResNet).
# TODO(synk): vxm.networks.SingleResNet + the ADNI/NIFD checkpoint are external and cannot
#             be reproduced here; features[0] is stood in by a deterministic 3x3x3 conv
#             (1 -> 16 channels) + ReLU (BN in eval mode with default stats is a no-op).
# ----------------------------------------------------------------------------
def _conv_mm_kernel(w_ref, p_ref, b_ref, o_ref):
    # w_ref: (O, K)  p_ref: (K, TR)  b_ref: (O, 1)  o_ref: (O, TR)  -- lane-dense output
    acc = jnp.dot(w_ref[...], p_ref[...], preferred_element_type=jnp.float32)
    o_ref[...] = jnp.maximum(acc + b_ref[...], 0.0)


def conv3x3x3_relu(x, w, b):
    """x: (N, 1, H, W, D); w: (O, 1, 3, 3, 3); b: (O,)  ->  (N, O, H, W, D)."""
    N, _, H, W, D = x.shape
    O = w.shape[0]
    xp = jnp.pad(x[:, 0], ((0, 0), (1, 1), (1, 1), (1, 1)))
    # TODO(synk): im2col is materialized host-side (27x HBM expansion); acceptable for this
    #             stand-in stage, an in-kernel tap gather would remove it.
    cols = [xp[:, a:a + H, bb:bb + W, c:c + D]
            for a in range(3) for bb in range(3) for c in range(3)]
    R = N * H * W * D
    K = 32                                                  # 27 taps zero-padded to 32
    patches = jnp.stack(cols, axis=0).reshape(27, R).astype(jnp.float32)
    patches = jnp.pad(patches, ((0, K - 27), (0, 0)))       # (K, R), lane-dense

    TR = min(2048, ((R + 127) // 128) * 128)                # big lane-dense row tile
    R_pad = ((R + TR - 1) // TR) * TR                       # cdiv grid, never one giant block
    if R_pad != R:
        patches = jnp.pad(patches, ((0, 0), (0, R_pad - R)))

    wmat = jnp.pad(w.reshape(O, 27).astype(jnp.float32), ((0, 0), (0, K - 27)))  # (O, K)
    bias = b.reshape(O, 1).astype(jnp.float32)                                   # (O, 1)

    out = pl.pallas_call(
        _conv_mm_kernel,
        out_shape=jax.ShapeDtypeStruct((O, R_pad), jnp.float32),
        grid_spec=pltpu.PrefetchScalarGridSpec(
            num_scalar_prefetch=0,
            grid=(R_pad // TR,),
            in_specs=[pl.BlockSpec((O, K), lambda r: (0, 0)),
                      pl.BlockSpec((K, TR), lambda r: (0, r)),
                      pl.BlockSpec((O, 1), lambda r: (0, 0))],
            out_specs=pl.BlockSpec((O, TR), lambda r: (0, r))),
        compiler_params=pltpu.CompilerParams(dimension_semantics=("parallel",)),
    )(wmat, patches, bias)

    out = out[:, :R].reshape(O, N, H, W, D)
    return out.transpose(1, 0, 2, 3, 4)                     # (N, O, H, W, D)


# ----------------------------------------------------------------------------
# Spatial-distance prior:  sp_dist = exp(-||g_i - g_j||^2), grid coords / (P + 1).
# (mirrors compute_meshgrid_3d + compute_l2_distance_3d + exp(-.) in __init__)
# ----------------------------------------------------------------------------
def compute_sp_dist(P):
    coords = jnp.arange(P, dtype=jnp.float32) / (P + 1)
    gh, gw, gd = jnp.meshgrid(coords, coords, coords, indexing="ij")
    g = jnp.stack([gh, gw, gd], axis=0).reshape(3, -1)      # (3, M)
    sq = jnp.sum(g * g, axis=0)                             # (M,)
    d = sq[:, None] + sq[None, :] - 2.0 * (g.T @ g)
    d = jnp.maximum(d, 0.0)
    return jnp.exp(-d)                                      # (M, M)


# ----------------------------------------------------------------------------
# CoBi kernel: Bt patches per grid step; per patch a cosine-similarity matmul
# (channel contraction of both (C, M) operands), relative distance, CX, column-max.
# ----------------------------------------------------------------------------
def _cobi_patch_kernel(x_ref, y_ref, spt_ref, out_ref, *, inv_bw, bt):
    # x_ref, y_ref: (Bt, C, M) lane-dense; spt_ref: (M, M) = 1 - 0.5*sp_dist;
    # out_ref: (Bt, 1, M)
    def body(b, carry):
        # cos_sim[i, j] = sum_c x[c, i] * y[c, j]  (x^T y, contraction on axis 0 of both)
        cos_sim = lax.dot_general(
            x_ref[b], y_ref[b], (((0,), (0,)), ((), ())),
            preferred_element_type=jnp.float32)                        # (M, M)
        d = spt_ref[...] - 0.5 * cos_sim                               # 1 - (raw + sp)/2
        d_min = jnp.min(d, axis=1, keepdims=True)                      # torch: min over dim=2
        d_tilde = d * pl.reciprocal(d_min + 1e-5, approx=True)         # per-row recip + VPU mul
        w = jnp.exp((1.0 - d_tilde) * inv_bw)
        cx = w * pl.reciprocal(jnp.sum(w, axis=1, keepdims=True), approx=True)
        out_ref[b] = jnp.max(cx, axis=0, keepdims=True)                # torch: max over dim=1
        return carry

    lax.fori_loop(0, bt, body, 0, unroll=True)


def cobi_loss_3d(feat_x, feat_y, sp_dist, band_width=0.1, patch_size=8, weight_sp=1.0):
    """feat_x / feat_y: (N, C, H, W, D) features; returns scalar CoBi loss."""
    # NOTE: the reference torch loss hard-codes dist_combined = (1*raw + 1*sp)/2 and never
    #       uses weight_sp inside the loss body, so it is intentionally ignored here too.
    del weight_sp
    N, C, H, W, D = feat_x.shape
    P = patch_size
    M = P ** 3

    # mean-shift by channel-wise mean of y, then L2-normalize over channels
    y_mu = jnp.mean(feat_y, axis=(0, 2, 3, 4), keepdims=True)
    xc = feat_x - y_mu
    yc = feat_y - y_mu
    xn = xc / jnp.maximum(jnp.sqrt(jnp.sum(xc * xc, axis=1, keepdims=True)), 1e-12)
    yn = yc / jnp.maximum(jnp.sqrt(jnp.sum(yc * yc, axis=1, keepdims=True)), 1e-12)

    def to_patch_mats(v):
        v = v.reshape(N, C, H // P, P, W // P, P, D // P, P)
        v = v.transpose(2, 4, 6, 0, 1, 3, 5, 7)             # (Hp, Wp, Dp, N, C, P, P, P)
        return v.reshape(-1, C, M)                          # (B, C, M) lane-dense

    xv = to_patch_mats(xn).astype(jnp.float32)              # (B, C, M) -- no host transpose
    yv = to_patch_mats(yn).astype(jnp.float32)              # (B, C, M)
    B = xv.shape[0]

    # batch several patches per grid step to amortize per-step overhead / tiny DMAs
    Bt = 1
    for cand in (8, 4, 2):
        if B % cand == 0:
            Bt = cand
            break

    # fold the constant part of the combined distance once (reused by every patch)
    sp_term = (1.0 - 0.5 * sp_dist).astype(jnp.float32)     # (M, M)

    kernel = functools.partial(_cobi_patch_kernel, inv_bw=1.0 / band_width, bt=Bt)
    cx_max = pl.pallas_call(
        kernel,
        out_shape=jax.ShapeDtypeStruct((B, 1, M), jnp.float32),
        grid_spec=pltpu.PrefetchScalarGridSpec(
            num_scalar_prefetch=0,
            grid=(B // Bt,),
            in_specs=[pl.BlockSpec((Bt, C, M), lambda g: (g, 0, 0)),
                      pl.BlockSpec((Bt, C, M), lambda g: (g, 0, 0)),
                      pl.BlockSpec((M, M), lambda g: (0, 0))],
            out_specs=pl.BlockSpec((Bt, 1, M), lambda g: (g, 0, 0))),
        compiler_params=pltpu.CompilerParams(dimension_semantics=("parallel",)),
    )(xv, yv, sp_term)

    cx_tot = jnp.mean(cx_max[:, 0, :], axis=1)              # (B,)  == mean over dim=2
    return jnp.mean(-jnp.log(cx_tot + 1e-5))


# ----------------------------------------------------------------------------
# Module wrapper (mirrors ContextualBilateralLoss3D_local).
# ----------------------------------------------------------------------------
class ContextualBilateralLoss3DLocal:
    def __init__(self, band_width=0.1, weight_sp=1.0, feat_map=8, n_basefilters=16,
                 key=None):
        assert band_width > 0
        self.band_width = band_width
        self.weight_sp = weight_sp
        self.patch_size = feat_map
        if key is None:
            key = jax.random.PRNGKey(42)
        kw, kb = jax.random.split(key)
        # deterministic stand-in weights for the first resnet conv block
        self.conv_w = 0.2 * jax.random.normal(kw, (n_basefilters, 1, 3, 3, 3), jnp.float32)
        self.conv_b = 0.01 * jax.random.normal(kb, (n_basefilters,), jnp.float32)
        self.sp_dist = compute_sp_dist(self.patch_size)

    def __call__(self, x, y):
        assert x.shape[1] == 1 and y.shape[1] == 1, "feature extractor takes 1-channel volumes"
        N = x.shape[0]
        # one feature-extraction pallas_call for both volumes (shared weights)
        feats = conv3x3x3_relu(jnp.concatenate([x, y], axis=0), self.conv_w, self.conv_b)
        fx, fy = feats[:N], feats[N:]
        return cobi_loss_3d(fx, fy, self.sp_dist,
                            band_width=self.band_width,
                            patch_size=self.patch_size,
                            weight_sp=self.weight_sp)


if __name__ == "__main__":
    key = jax.random.PRNGKey(0)
    k1, k2, k3 = jax.random.split(key, 3)
    # small 3D volumes, 1 channel, spatial 16 (divisible by patch_size=8)
    x = jax.random.normal(k1, (1, 1, 16, 16, 16), jnp.float32)
    y = jax.random.normal(k2, (1, 1, 16, 16, 16), jnp.float32)

    loss_mod = ContextualBilateralLoss3DLocal(band_width=0.1, weight_sp=1.0,
                                              feat_map=8, n_basefilters=16, key=k3)
    loss = loss_mod(x, y)
    loss = jax.block_until_ready(loss)
    if bool(jnp.isfinite(loss)):
        print("KERNEL_OK")
</pallas_src>

<mosaic_0001>
module attributes {stable_mosaic.version = 11 : i64} {
  func.func @_conv_mm_kernel(%arg0: i32, %arg1: memref<16x32xf32, #tpu.memory_space<vmem>>, %arg2: memref<32x2048xf32, #tpu.memory_space<vmem>>, %arg3: memref<16x1xf32, #tpu.memory_space<vmem>>, %arg4: memref<16x2048xf32, #tpu.memory_space<vmem>>) attributes {dimension_semantics = [#tpu.dimension_semantics<parallel>], iteration_bounds = array<i64: 4>, scalar_prefetch = 0 : i64, scratch_operands = 0 : i64, tpu.core_type = #tpu.core_type<tc>, window_params = [{pipeline_mode = #tpu.pipeline_mode<synchronous>, transform_indices = @transform_0, window_bounds = array<i64: 16, 32>}, {transform_indices = @transform_1, window_bounds = array<i64: 32, 2048>}, {pipeline_mode = #tpu.pipeline_mode<synchronous>, transform_indices = @transform_2, window_bounds = array<i64: 16, 1>}, {transform_indices = @transform_3, window_bounds = array<i64: 16, 2048>}]} {
    %c0 = arith.constant 0 : index
    %c0_0 = arith.constant 0 : index
    %0 = vector.load %arg1[%c0, %c0_0] : memref<16x32xf32, #tpu.memory_space<vmem>>, vector<16x32xf32>
    %c0_1 = arith.constant 0 : index
    %c0_2 = arith.constant 0 : index
    %1 = vector.load %arg2[%c0_1, %c0_2] : memref<32x2048xf32, #tpu.memory_space<vmem>>, vector<32x2048xf32>
    %cst = arith.constant dense<0.000000e+00> : vector<16x2048xf32>
    %2 = tpu.matmul %0, %1, %cst {dimension_numbers = #tpu.dot_dimension_numbers<[1], [0], [0], [1], [0, 0, 1, 1], [], []>} : vector<16x32xf32>, vector<32x2048xf32>, vector<16x2048xf32> -> vector<16x2048xf32>
    %c0_3 = arith.constant 0 : index
    %c0_4 = arith.constant 0 : index
    %3 = vector.load %arg3[%c0_3, %c0_4] : memref<16x1xf32, #tpu.memory_space<vmem>>, vector<16x1xf32>
    %4 = vector.broadcast %3 : vector<16x1xf32> to vector<16x2048xf32>
    %5 = arith.addf %2, %4 : vector<16x2048xf32>
    %cst_5 = arith.constant 0.000000e+00 : f32
    %6 = vector.broadcast %cst_5 : f32 to vector<16x2048xf32>
    %7 = arith.maximumf %5, %6 : vector<16x2048xf32>
    %c0_6 = arith.constant 0 : index
    %c0_7 = arith.constant 0 : index
    %8 = vector.load %arg4[%c0_6, %c0_7] : memref<16x2048xf32, #tpu.memory_space<vmem>>, vector<16x2048xf32>
    tpu.vector_store %arg4[%c0_6, %c0_7], %7 {strides = array<i32>} : memref<16x2048xf32, #tpu.memory_space<vmem>>, vector<16x2048xf32>,
    return
  }
  func.func @transform_0(%arg0: i32) -> (i32, i32) {
    %c0_i32 = arith.constant 0 : i32
    %c0_i32_0 = arith.constant 0 : i32
    %c0_i32_1 = arith.constant 0 : i32
    return %c0_i32, %c0_i32_0 : i32, i32
  }
  func.func @transform_1(%arg0: i32) -> (i32, i32) {
    %c0_i32 = arith.constant 0 : i32
    %c0_i32_0 = arith.constant 0 : i32
    return %c0_i32, %arg0 : i32, i32
  }
  func.func @transform_2(%arg0: i32) -> (i32, i32) {
    %c0_i32 = arith.constant 0 : i32
    %c0_i32_0 = arith.constant 0 : i32
    %c0_i32_1 = arith.constant 0 : i32
    return %c0_i32, %c0_i32_0 : i32, i32
  }
  func.func @transform_3(%arg0: i32) -> (i32, i32) {
    %c0_i32 = arith.constant 0 : i32
    %c0_i32_0 = arith.constant 0 : i32
    return %c0_i32, %arg0 : i32, i32
  }
}

</mosaic_0001>

<llo_original>
// kernel: tpu_custom_call.1
$region0: #{tpu_custom_call.1}
  #allocation0 [shape = 'u32[]', space=smem, size = 0x4, offset = 0x4, fixed_abs, tag = 'smem constant byte address 0x4 - core index']
  #allocation1 [shape = 'u32[144,128]{1,0:T(1,128)}', space=vmem, size = 0x12000, scoped, tag = 'internal scratch']
  %s0 = inlined_call_operand.vmem [shape: f32[16,32], index: 0, kind: input, shape index: {}]
  %s1 = inlined_call_operand.hbm [shape: f32[32,8192], index: 1, kind: input, shape index: {}]
  %s2 = inlined_call_operand.vmem [shape: f32[16,1], index: 2, kind: input, shape index: {}]
  %s3 = inlined_call_operand.hbm [shape: f32[16,8192], index: 3, kind: output, shape index: {}]
  %s4 = sld [smem:[#allocation0]]
  $region49: #{tpu_custom_call.1} parent=0
    _
  %s6 = ssub.s32 1, %s4
  %s7 = scalar_select 0, %s6, %s4
  $region1: #{tpu_custom_call.1} parent=0
    #allocation2 [shape = 'u8[524288]{0}', space=vmem, size = 0x80000, scoped, tag = 'input window, operand 1']
    #allocation3 [shape = 's32[2]{0}', space=sflag, size = 0x8, scoped, tag = 'scoped memory for tpu_custom_call.1']
    #allocation4 [shape = 's32[2]{0}', space=sflag, size = 0x8, scoped, tag = 'scoped memory for tpu_custom_call.1']
    #allocation5 [shape = 'u8[262144]{0}', space=vmem, size = 0x40000, scoped, tag = 'output window, operand 0']
    %8 = vsyncpa [#allocation3], 0
    %s9 = scalar_lea.sflag [#allocation3], 1
    %10 = vsyncpa %s9, 0
    %11 = vsyncpa [#allocation4], 0
    %s12 = scalar_lea.sflag [#allocation4], 1
    %13 = vsyncpa %s12, 0
    loop: start=0, step=1, limit=6
    $region2: #{tpu_custom_call.1} parent=1 // loop_pre_header
      _
    $region3: #{tpu_custom_call.1} parent=1 // loop_header
      %s15 = sphi 0, %s19
      %p16 = scmp.ge.s32.totalorder %s15, 6
      %s23 = sphi 0, %s23
      %s25 = sphi 0, %s23
      %s26 = sphi 0, %s25
      %s40 = sphi 0, %s26
      %s46 = sphi 0, %s48
      %s49 = sphi 0, %s46
      %s50 = sphi 0, %s49
      %s66 = sphi 0, %s50
      %s70 = sphi 0, %s70
      %s72 = sphi 0, %s70
      %s73 = sphi 0, %s72
      %s87 = sphi 0, %s73
      %s93 = sphi 0, %s95
      %s96 = sphi 0, %s93
      %s97 = sphi 0, %s96
      %s113 = sphi 0, %s97
    $region4: #{tpu_custom_call.1} parent=1 // loop_header_branch
      %18 = sbr.rel (%p16) target = $region8
    $region5: #{tpu_custom_call.1} parent=1 // loop_body
      %s20 = ssub.s32 %s15, 1
      %s21 = ssub.s32 %s15, 2
      %s22 = sadd.s32 %s15, 1
      %s24 = sadd.s32 %s23, 1
      %p27 = scmp.eq.s32.totalorder %s15, 3
      %p28 = scmp.ne.s32.totalorder %s23, %s25
      %p29 = scmp.eq.s32.totalorder %s15, 0
      %p30 = por %p28, %p29
      %p31 = scmp.ne.s32.totalorder %s23, %s25
      %p32 = scmp.eq.s32.totalorder %s20, 3
      %p33 = por %p31, %p32
      %p34 = scmp.ne.s32.totalorder %s25, %s26
      %p35 = scmp.eq.s32.totalorder %s20, 0
      %p36 = por %p34, %p35
      %p37 = scmp.ne.s32.totalorder %s25, %s26
      %p38 = scmp.eq.s32.totalorder %s21, 3
      %p39 = por %p37, %p38
      %p41 = scmp.ne.s32.totalorder %s26, %s40
      %p42 = scmp.eq.s32.totalorder %s21, 0
      %p43 = por %p41, %p42
      %s44 = ssub.s32 %s15, %s22
      %p45 = scmp.eq.s32.totalorder %s44, 0
      %s47 = sadd.s32 %s46, 1
      %s48 = scalar_select %p45, %s46, %s47
      %p51 = pneg %p45
      %p52 = scmp.eq.s32.totalorder %s15, 3
      %p53 = por %p51, %p52
      %p54 = scmp.ne.s32.totalorder %s46, %s49
      %p55 = scmp.eq.s32.totalorder %s15, 0
      %p56 = por %p54, %p55
      %p57 = scmp.ne.s32.totalorder %s46, %s49
      %p58 = scmp.eq.s32.totalorder %s20, 3
      %p59 = por %p57, %p58
      %p60 = scmp.ne.s32.totalorder %s49, %s50
      %p61 = scmp.eq.s32.totalorder %s20, 0
      %p62 = por %p60, %p61
      %p63 = scmp.ne.s32.totalorder %s49, %s50
      %p64 = scmp.eq.s32.totalorder %s21, 3
      %p65 = por %p63, %p64
      %p67 = scmp.ne.s32.totalorder %s50, %s66
      %p68 = scmp.eq.s32.totalorder %s21, 0
      %p69 = por %p67, %p68
      %s71 = sadd.s32 %s70, 1
      %p74 = scmp.eq.s32.totalorder %s15, 3
      %p75 = scmp.ne.s32.totalorder %s70, %s72
      %p76 = scmp.eq.s32.totalorder %s15, 0
      %p77 = por %p75, %p76
      %p78 = scmp.ne.s32.totalorder %s70, %s72
      %p79 = scmp.eq.s32.totalorder %s20, 3
      %p80 = por %p78, %p79
      %p81 = scmp.ne.s32.totalorder %s72, %s73
      %p82 = scmp.eq.s32.totalorder %s20, 0
      %p83 = por %p81, %p82
      %p84 = scmp.ne.s32.totalorder %s72, %s73
      %p85 = scmp.eq.s32.totalorder %s21, 3
      %p86 = por %p84, %p85
      %p88 = scmp.ne.s32.totalorder %s73, %s87
      %p89 = scmp.eq.s32.totalorder %s21, 0
      %p90 = por %p88, %p89
      %s91 = ssub.s32 %s15, %s22
      %p92 = scmp.eq.s32.totalorder %s91, 0
      %s94 = sadd.s32 %s93, 1
      %s95 = scalar_select %p92, %s93, %s94
      %p98 = pneg %p92
      %p99 = scmp.eq.s32.totalorder %s15, 3
      %p100 = por %p98, %p99
      %p101 = scmp.ne.s32.totalorder %s93, %s96
      %p102 = scmp.eq.s32.totalorder %s15, 0
      %p103 = por %p101, %p102
      %p104 = scmp.ne.s32.totalorder %s93, %s96
      %p105 = scmp.eq.s32.totalorder %s20, 3
      %p106 = por %p104, %p105
      %p107 = scmp.ne.s32.totalorder %s96, %s97
      %p108 = scmp.eq.s32.totalorder %s20, 0
      %p109 = por %p107, %p108
      %p110 = scmp.ne.s32.totalorder %s96, %s97
      %p111 = scmp.eq.s32.totalorder %s21, 3
      %p112 = por %p110, %p111
      %p114 = scmp.ne.s32.totalorder %s97, %s113
      %p115 = scmp.eq.s32.totalorder %s21, 0
      %p116 = por %p114, %p115
      %p117 = scmp.le.s32.totalorder 1, %s15
      %p118 = scmp.lt.s32.totalorder %s15, 5
      %p119 = pnand %p117, %p118
      %p120 = pneg %p119
      // Predicated region
      $region9: #{tpu_custom_call.1} parent=5 // pred_check
        _
      $region10: #{tpu_custom_call.1} parent=5 // pred_check_branch
        %122 = sbr.rel (%p119) target = $region12
      $region11: #{tpu_custom_call.1} parent=5 // pred_region
        %s123 = ssub.s32 %s15, 1
        // Predicated region
        $region13: #{tpu_custom_call.1} parent=11 // pred_check
          %p124 = pneg %p36
        $region14: #{tpu_custom_call.1} parent=11 // pred_check_branch
          %126 = sbr.rel (%p124) target = $region16
        $region15: #{tpu_custom_call.1} parent=11 // pred_region
          _
        $region16: #{tpu_custom_call.1} parent=11 // pred_fallthru
          _
        // Predicated region
        $region17: #{tpu_custom_call.1} parent=11 // pred_check
          %p127 = pneg %p83
        $region18: #{tpu_custom_call.1} parent=11 // pred_check_branch
          %129 = sbr.rel (%p127) target = $region20
        $region19: #{tpu_custom_call.1} parent=11 // pred_region
          _
        $region20: #{tpu_custom_call.1} parent=11 // pred_fallthru
          _
      $region12: #{tpu_custom_call.1} parent=5 // pred_fallthru
        _
      %p130 = scmp.lt.s32.totalorder %s15, 4
      // Predicated region
      $region21: #{tpu_custom_call.1} parent=5 // pred_check
        %p131 = pneg %p130
      $region22: #{tpu_custom_call.1} parent=5 // pred_check_branch
        %133 = sbr.rel (%p131) target = $region24
      $region23: #{tpu_custom_call.1} parent=5 // pred_region
        // Predicated region
        $region25: #{tpu_custom_call.1} parent=23 // pred_check
          %p134 = pneg %p56
        $region26: #{tpu_custom_call.1} parent=23 // pred_check_branch
          %136 = sbr.rel (%p134) target = $region28
        $region27: #{tpu_custom_call.1} parent=23 // pred_region
          %s137 = sand.u32 %s46, 1
          %s138 = scalar_lea.sflag [#allocation3], %s137
          %s139 = sand.u32 %s46, 1
          %s140 = smul.addr %s139, 512
          %s141 = scalar_lea.vmem [#allocation2], %s140
          %s142 = smul.u32 16, %s15
          %s144 = ssub.s32 8192, 8192
          %145 = vsyncadd %s138, %s144
          %s146 = smul.addr %s142, 128
          %s147 = scalar_lea.hbm %s1, %s146
          %s148 = sshll.u32 %s141, 4
          %s149 = int_to_ptr.vmem [resolvable:$true] %s148
          %154 = dma.hbm_to_vmem [thread:$0]  %s147, 8192, %s149, %s138, 8192, 2048, 128
        $region28: #{tpu_custom_call.1} parent=23 // pred_fallthru
          _
      $region24: #{tpu_custom_call.1} parent=5 // pred_fallthru
        _
      %p155 = scmp.le.s32.totalorder 1, %s15
      %p156 = scmp.lt.s32.totalorder %s15, 5
      %p157 = pnand %p155, %p156
      %p158 = pneg %p157
      // Predicated region
      $region29: #{tpu_custom_call.1} parent=5 // pred_check
        _
      $region30: #{tpu_custom_call.1} parent=5 // pred_check_branch
        %160 = sbr.rel (%p157) target = $region32
      $region31: #{tpu_custom_call.1} parent=5 // pred_region
        %s161 = ssub.s32 %s15, 1
        %s162 = sand.u32 %s49, 1
        %s163 = scalar_lea.sflag [#allocation3], %s162
        %s164 = sand.u32 %s49, 1
        %s165 = smul.addr %s164, 512
        %s166 = scalar_lea.vmem [#allocation2], %s165
        // Predicated region
        $region33: #{tpu_custom_call.1} parent=31 // pred_check
          %p167 = pneg %p62
        $region34: #{tpu_custom_call.1} parent=31 // pred_check_branch
          %169 = sbr.rel (%p167) target = $region36
        $region35: #{tpu_custom_call.1} parent=31 // pred_region
          %170 = dma.done %s163, 8192
        $region36: #{tpu_custom_call.1} parent=31 // pred_fallthru
          _
        %p171 = pneg %p36
        %p172 = pneg %p33
        %s173 = sand.u32 %s49, 1
        %s174 = scalar_lea.sflag [#allocation3], %s173
        %s175 = sand.u32 %s49, 1
        %s176 = smul.addr %s175, 512
        %s177 = scalar_lea.vmem [#allocation2], %s176
        %p178 = pneg %p62
        %p179 = pneg %p59
        %p180 = pneg %p83
        %p181 = pneg %p80
        %p182 = pneg %p109
        %p183 = pneg %p106
        %s184 = sand.u32 %s96, 1
        %s185 = scalar_lea.sflag [#allocation4], %s184
        %s186 = sand.u32 %s96, 1
        %s187 = smul.addr %s186, 256
        %s188 = scalar_lea.vmem [#allocation5], %s187
        %s189 = smul.u32 16, %s20
        %s190 = smul.u32 16, %s20
        %v191 = vld [vmem:[%s0] sm:$0xff]
        %v192 = vld [vmem:[%s0 + $0x8] sm:$0xff]
        %v193 = vld [vmem:[%s166] sm:$0xff]
        %v194 = vld [vmem:[%s166 + $0x8] sm:$0xff]
        %v195 = vld [vmem:[%s166 + $0x10] sm:$0xff]
        %v196 = vld [vmem:[%s166 + $0x18] sm:$0xff]
        %v197 = vld [vmem:[%s166 + $0x20] sm:$0xff]
        %v198 = vld [vmem:[%s166 + $0x28] sm:$0xff]
        %v199 = vld [vmem:[%s166 + $0x30] sm:$0xff]
        %v200 = vld [vmem:[%s166 + $0x38] sm:$0xff]
        %v201 = vld [vmem:[%s166 + $0x40] sm:$0xff]
        %v202 = vld [vmem:[%s166 + $0x48] sm:$0xff]
        %v203 = vld [vmem:[%s166 + $0x50] sm:$0xff]
        %v204 = vld [vmem:[%s166 + $0x58] sm:$0xff]
        %v205 = vld [vmem:[%s166 + $0x60] sm:$0xff]
        %v206 = vld [vmem:[%s166 + $0x68] sm:$0xff]
        %v207 = vld [vmem:[%s166 + $0x70] sm:$0xff]
        %v208 = vld [vmem:[%s166 + $0x78] sm:$0xff]
        %v209 = vld [vmem:[%s166 + $0x80] sm:$0xff]
        %v210 = vld [vmem:[%s166 + $0x88] sm:$0xff]
        %v211 = vld [vmem:[%s166 + $0x90] sm:$0xff]
        %v212 = vld [vmem:[%s166 + $0x98] sm:$0xff]
        %v213 = vld [vmem:[%s166 + $0xa0] sm:$0xff]
        %v214 = vld [vmem:[%s166 + $0xa8] sm:$0xff]
        %v215 = vld [vmem:[%s166 + $0xb0] sm:$0xff]
        %v216 = vld [vmem:[%s166 + $0xb8] sm:$0xff]
        %v217 = vld [vmem:[%s166 + $0xc0] sm:$0xff]
        %v218 = vld [vmem:[%s166 + $0xc8] sm:$0xff]
        %v219 = vld [vmem:[%s166 + $0xd0] sm:$0xff]
        %v220 = vld [vmem:[%s166 + $0xd8] sm:$0xff]
        %v221 = vld [vmem:[%s166 + $0xe0] sm:$0xff]
        %v222 = vld [vmem:[%s166 + $0xe8] sm:$0xff]
        %v223 = vld [vmem:[%s166 + $0xf0] sm:$0xff]
        %v224 = vld [vmem:[%s166 + $0xf8] sm:$0xff]
        %v225 = vld [vmem:[%s166 + $0x100] sm:$0xff]
        %v226 = vld [vmem:[%s166 + $0x108] sm:$0xff]
        %v227 = vld [vmem:[%s166 + $0x110] sm:$0xff]
        %v228 = vld [vmem:[%s166 + $0x118] sm:$0xff]
        %v229 = vld [vmem:[%s166 + $0x120] sm:$0xff]
        %v230 = vld [vmem:[%s166 + $0x128] sm:$0xff]
        %v231 = vld [vmem:[%s166 + $0x130] sm:$0xff]
        %v232 = vld [vmem:[%s166 + $0x138] sm:$0xff]
        %v233 = vld [vmem:[%s166 + $0x140] sm:$0xff]
        %v234 = vld [vmem:[%s166 + $0x148] sm:$0xff]
        %v235 = vld [vmem:[%s166 + $0x150] sm:$0xff]
        %v236 = vld [vmem:[%s166 + $0x158] sm:$0xff]
        %v237 = vld [vmem:[%s166 + $0x160] sm:$0xff]
        %v238 = vld [vmem:[%s166 + $0x168] sm:$0xff]
        %v239 = vld [vmem:[%s166 + $0x170] sm:$0xff]
        %v240 = vld [vmem:[%s166 + $0x178] sm:$0xff]
        %v241 = vld [vmem:[%s166 + $0x180] sm:$0xff]
        %v242 = vld [vmem:[%s166 + $0x188] sm:$0xff]
        %v243 = vld [vmem:[%s166 + $0x190] sm:$0xff]
        %v244 = vld [vmem:[%s166 + $0x198] sm:$0xff]
        %v245 = vld [vmem:[%s166 + $0x1a0] sm:$0xff]
        %v246 = vld [vmem:[%s166 + $0x1a8] sm:$0xff]
        %v247 = vld [vmem:[%s166 + $0x1b0] sm:$0xff]
        %v248 = vld [vmem:[%s166 + $0x1b8] sm:$0xff]
        %v249 = vld [vmem:[%s166 + $0x1c0] sm:$0xff]
        %v250 = vld [vmem:[%s166 + $0x1c8] sm:$0xff]
        %v251 = vld [vmem:[%s166 + $0x1d0] sm:$0xff]
        %v252 = vld [vmem:[%s166 + $0x1d8] sm:$0xff]
        %v253 = vld [vmem:[%s166 + $0x1e0] sm:$0xff]
        %v254 = vld [vmem:[%s166 + $0x1e8] sm:$0xff]
        %v255 = vld [vmem:[%s166 + $0x1f0] sm:$0xff]
        %v256 = vld [vmem:[%s166 + $0x1f8] sm:$0xff]
        %v257 = vld [vmem:[%s2] sm:$0xff]
        %v258 = vld [vmem:[%s2 + $0x8] sm:$0xff]
        %260 = vset.pattern.permute.xlu0 0
        %261 = vperm.xlu0 %260, %v257
        %v262 = vpop.permute.xlu0 %261
        %265 = vset.pattern.permute.xlu0 0
        %266 = vperm.xlu0 %265, %v258
        %v267 = vpop.permute.xlu0 %266
        %vm269 = vcmask 261120
        %v271 = vsel %vm269, %v191, 0
        %v274 = vsel %vm269, %v192, 0
        %276 = vmatprep.subr.mxu0 %v194
        %277 = vmatpush1.msra.mxu0 %v193
        %278 = vmatprep.subr.mxu0 %v210
        %279 = vmatpush1.msra.mxu0 %v209
        %280 = vmatprep.subr.mxu0 %v226
        %281 = vmatpush1.msra.mxu0 %v225
        %282 = vmatprep.subr.mxu0 %v242
        %283 = vmatpush1.msra.mxu0 %v241
        %284 = vmatprep.subr.mxu0 0.0
        %285 = vmatpush1.msra.mxu0 0.0
        %286 = vmatprep.subr.mxu0 0.0
        %287 = vmatpush1.msra.mxu0 0.0
        %288 = vmatprep.subr.mxu0 0.0
        %289 = vmatpush1.msra.mxu0 0.0
        %290 = vmatprep.subr.mxu0 0.0
        %291 = vmatpush1.msra.mxu0 0.0
        %292 = vmatprep.subr.mxu0 0.0
        %293 = vmatpush1.msra.mxu0 0.0
        %294 = vmatprep.subr.mxu0 0.0
        %295 = vmatpush1.msra.mxu0 0.0
        %296 = vmatprep.subr.mxu0 0.0
        %297 = vmatpush1.msra.mxu0 0.0
        %298 = vmatprep.subr.mxu0 0.0
        %299 = vmatpush1.msra.mxu0 0.0
        %300 = vmatprep.subr.mxu0 0.0
        %301 = vmatpush1.msra.mxu0 0.0
        %302 = vmatprep.subr.mxu0 0.0
        %303 = vmatpush1.msra.mxu0 0.0
        %304 = vmatprep.subr.mxu0 0.0
        %305 = vmatpush1.msra.mxu0 0.0
        %306 = vmatprep.subr.mxu0 0.0
        %307 = vmatpush1.msra.mxu0 0.0
        %308 = vmatprep.subr.mxu0 0.0
        %309 = vmatpush1.msra.mxu0 0.0
        %310 = vmatprep.subr.mxu0 0.0
        %311 = vmatpush1.msra.mxu0 0.0
        %312 = vmatprep.subr.mxu0 0.0
        %313 = vmatpush1.msra.mxu0 0.0
        %314 = vmatprep.subr.mxu0 0.0
        %315 = vmatpush1.msra.mxu0 0.0
        %316 = vmatprep.subr.mxu0 0.0
        %317 = vmatpush1.msra.mxu0 0.0
        %318 = vmatprep.subr.mxu0 0.0
        %319 = vmatpush1.msra.mxu0 0.0
        %320 = vmatprep.subr.mxu0 0.0
        %321 = vmatpush1.msra.mxu0 0.0
        %322 = vmatprep.subr.mxu0 0.0
        %323 = vmatpush1.msra.mxu0 0.0
        %324 = vmatprep.subr.mxu0 0.0
        %325 = vmatpush1.msra.mxu0 0.0
        %326 = vmatprep.subr.mxu0 0.0
        %327 = vmatpush1.msra.mxu0 0.0
        %328 = vmatprep.subr.mxu0 0.0
        %329 = vmatpush1.msra.mxu0 0.0
        %330 = vmatprep.subr.mxu0 0.0
        %331 = vmatpush1.msra.mxu0 0.0
        %332 = vmatprep.subr.mxu0 0.0
        %333 = vmatpush1.msra.mxu0 0.0
        %334 = vmatprep.subr.mxu0 0.0
        %335 = vmatpush1.msra.mxu0 0.0
        %336 = vmatprep.subr.mxu0 0.0
        %337 = vmatpush1.msra.mxu0 0.0
        %338 = vmatprep.subr.mxu0 0.0
        %339 = vmatpush1.msra.mxu0 0.0
        %340 = vmatprep.mubr.f32.mxu0 0.0
        %341 = vmatmul.mubr.f32.gmra.mrb[0].mxu0 %v271
        %v342 = vpop.f32.mrb[0].mxu0
        %v343 = vadd.f32 %v262, %v342
        %v344 = vpop.f32.mrb[0].mxu0
        %v345 = vadd.f32 %v262, %v344
        %346 = vmatprep.mubr.f32.mxu0 0.0
        %347 = vmatmul.mubr.f32.gmra.mrb[0].mxu0 %v274
        %v348 = vpop.f32.mrb[0].mxu0
        %v349 = vadd.f32 %v267, %v348
        %v350 = vpop.f32.mrb[0].mxu0
        %v351 = vadd.f32 %v267, %v350
        %352 = vdwg.mxu0
        %353 = vmatprep.subr.mxu0 %v196
        %354 = vmatpush1.msra.mxu0 %v195
        %355 = vmatprep.subr.mxu0 %v212
        %356 = vmatpush1.msra.mxu0 %v211
        %357 = vmatprep.subr.mxu0 %v228
        %358 = vmatpush1.msra.mxu0 %v227
        %359 = vmatprep.subr.mxu0 %v244
        %360 = vmatpush1.msra.mxu0 %v243
        %361 = vmatprep.subr.mxu0 0.0
        %362 = vmatpush1.msra.mxu0 0.0
        %363 = vmatprep.subr.mxu0 0.0
        %364 = vmatpush1.msra.mxu0 0.0
        %365 = vmatprep.subr.mxu0 0.0
        %366 = vmatpush1.msra.mxu0 0.0
        %367 = vmatprep.subr.mxu0 0.0
        %368 = vmatpush1.msra.mxu0 0.0
        %369 = vmatprep.subr.mxu0 0.0
        %370 = vmatpush1.msra.mxu0 0.0
        %371 = vmatprep.subr.mxu0 0.0
        %372 = vmatpush1.msra.mxu0 0.0
        %373 = vmatprep.subr.mxu0 0.0
        %374 = vmatpush1.msra.mxu0 0.0
        %375 = vmatprep.subr.mxu0 0.0
        %376 = vmatpush1.msra.mxu0 0.0
        %377 = vmatprep.subr.mxu0 0.0
        %378 = vmatpush1.msra.mxu0 0.0
        %379 = vmatprep.subr.mxu0 0.0
        %380 = vmatpush1.msra.mxu0 0.0
        %381 = vmatprep.subr.mxu0 0.0
        %382 = vmatpush1.msra.mxu0 0.0
        %383 = vmatprep.subr.mxu0 0.0
        %384 = vmatpush1.msra.mxu0 0.0
        %385 = vmatprep.subr.mxu0 0.0
        %386 = vmatpush1.msra.mxu0 0.0
        %387 = vmatprep.subr.mxu0 0.0
        %388 = vmatpush1.msra.mxu0 0.0
        %389 = vmatprep.subr.mxu0 0.0
        %390 = vmatpush1.msra.mxu0 0.0
        %391 = vmatprep.subr.mxu0 0.0
        %392 = vmatpush1.msra.mxu0 0.0
        %393 = vmatprep.subr.mxu0 0.0
        %394 = vmatpush1.msra.mxu0 0.0
        %395 = vmatprep.subr.mxu0 0.0
        %396 = vmatpush1.msra.mxu0 0.0
        %397 = vmatprep.subr.mxu0 0.0
        %398 = vmatpush1.msra.mxu0 0.0
        %399 = vmatprep.subr.mxu0 0.0
        %400 = vmatpush1.msra.mxu0 0.0
        %401 = vmatprep.subr.mxu0 0.0
        %402 = vmatpush1.msra.mxu0 0.0
        %403 = vmatprep.subr.mxu0 0.0
        %404 = vmatpush1.msra.mxu0 0.0
        %405 = vmatprep.subr.mxu0 0.0
        %406 = vmatpush1.msra.mxu0 0.0
        %407 = vmatprep.subr.mxu0 0.0
        %408 = vmatpush1.msra.mxu0 0.0
        %409 = vmatprep.subr.mxu0 0.0
        %410 = vmatpush1.msra.mxu0 0.0
        %411 = vmatprep.subr.mxu0 0.0
        %412 = vmatpush1.msra.mxu0 0.0
        %413 = vmatprep.subr.mxu0 0.0
        %414 = vmatpush1.msra.mxu0 0.0
        %415 = vmatprep.subr.mxu0 0.0
        %416 = vmatpush1.msra.mxu0 0.0
        %417 = vmatprep.mubr.f32.mxu0 0.0
        %418 = vmatmul.mubr.f32.gmra.mrb[0].mxu0 %v271
        %v419 = vpop.f32.mrb[0].mxu0
        %v420 = vadd.f32 %v262, %v419
        %v421 = vpop.f32.mrb[0].mxu0
        %v422 = vadd.f32 %v262, %v421
        %423 = vmatprep.mubr.f32.mxu0 0.0
        %424 = vmatmul.mubr.f32.gmra.mrb[0].mxu0 %v274
        %v425 = vpop.f32.mrb[0].mxu0
        %v426 = vadd.f32 %v267, %v425
        %v427 = vpop.f32.mrb[0].mxu0
        %v428 = vadd.f32 %v267, %v427
        %429 = vdwg.mxu0
        %430 = vmatprep.subr.mxu0 %v198
        %431 = vmatpush1.msra.mxu0 %v197
        %432 = vmatprep.subr.mxu0 %v214
        %433 = vmatpush1.msra.mxu0 %v213
        %434 = vmatprep.subr.mxu0 %v230
        %435 = vmatpush1.msra.mxu0 %v229
        %436 = vmatprep.subr.mxu0 %v246
        %437 = vmatpush1.msra.mxu0 %v245
        %438 = vmatprep.subr.mxu0 0.0
        %439 = vmatpush1.msra.mxu0 0.0
        %440 = vmatprep.subr.mxu0 0.0
        %441 = vmatpush1.msra.mxu0 0.0
        %442 = vmatprep.subr.mxu0 0.0
        %443 = vmatpush1.msra.mxu0 0.0
        %444 = vmatprep.subr.mxu0 0.0
        %445 = vmatpush1.msra.mxu0 0.0
        %446 = vmatprep.subr.mxu0 0.0
        %447 = vmatpush1.msra.mxu0 0.0
        %448 = vmatprep.subr.mxu0 0.0
        %449 = vmatpush1.msra.mxu0 0.0
        %450 = vmatprep.subr.mxu0 0.0
        %451 = vmatpush1.msra.mxu0 0.0
        %452 = vmatprep.subr.mxu0 0.0
        %453 = vmatpush1.msra.mxu0 0.0
        %454 = vmatprep.subr.mxu0 0.0
        %455 = vmatpush1.msra.mxu0 0.0
        %456 = vmatprep.subr.mxu0 0.0
        %457 = vmatpush1.msra.mxu0 0.0
        %458 = vmatprep.subr.mxu0 0.0
        %459 = vmatpush1.msra.mxu0 0.0
        %460 = vmatprep.subr.mxu0 0.0
        %461 = vmatpush1.msra.mxu0 0.0
        %462 = vmatprep.subr.mxu0 0.0
        %463 = vmatpush1.msra.mxu0 0.0
        %464 = vmatprep.subr.mxu0 0.0
        %465 = vmatpush1.msra.mxu0 0.0
        %466 = vmatprep.subr.mxu0 0.0
        %467 = vmatpush1.msra.mxu0 0.0
        %468 = vmatprep.subr.mxu0 0.0
        %469 = vmatpush1.msra.mxu0 0.0
        %470 = vmatprep.subr.mxu0 0.0
        %471 = vmatpush1.msra.mxu0 0.0
        %472 = vmatprep.subr.mxu0 0.0
        %473 = vmatpush1.msra.mxu0 0.0
        %474 = vmatprep.subr.mxu0 0.0
        %475 = vmatpush1.msra.mxu0 0.0
        %476 = vmatprep.subr.mxu0 0.0
        %477 = vmatpush1.msra.mxu0 0.0
        %478 = vmatprep.subr.mxu0 0.0
        %479 = vmatpush1.msra.mxu0 0.0
        %480 = vmatprep.subr.mxu0 0.0
        %481 = vmatpush1.msra.mxu0 0.0
        %482 = vmatprep.subr.mxu0 0.0
        %483 = vmatpush1.msra.mxu0 0.0
        %484 = vmatprep.subr.mxu0 0.0
        %485 = vmatpush1.msra.mxu0 0.0
        %486 = vmatprep.subr.mxu0 0.0
        %487 = vmatpush1.msra.mxu0 0.0
        %488 = vmatprep.subr.mxu0 0.0
        %489 = vmatpush1.msra.mxu0 0.0
        %490 = vmatprep.subr.mxu0 0.0
        %491 = vmatpush1.msra.mxu0 0.0
        %492 = vmatprep.subr.mxu0 0.0
        %493 = vmatpush1.msra.mxu0 0.0
        %494 = vmatprep.mubr.f32.mxu0 0.0
        %495 = vmatmul.mubr.f32.gmra.mrb[0].mxu0 %v271
        %v496 = vpop.f32.mrb[0].mxu0
        %v497 = vadd.f32 %v262, %v496
        %v498 = vpop.f32.mrb[0].mxu0
        %v499 = vadd.f32 %v262, %v498
        %500 = vmatprep.mubr.f32.mxu0 0.0
        %501 = vmatmul.mubr.f32.gmra.mrb[0].mxu0 %v274
        %v502 = vpop.f32.mrb[0].mxu0
        %v503 = vadd.f32 %v267, %v502
        %v504 = vpop.f32.mrb[0].mxu0
        %v505 = vadd.f32 %v267, %v504
        %506 = vdwg.mxu0
        %507 = vmatprep.subr.mxu0 %v200
        %508 = vmatpush1.msra.mxu0 %v199
        %509 = vmatprep.subr.mxu0 %v216
        %510 = vmatpush1.msra.mxu0 %v215
        %511 = vmatprep.subr.mxu0 %v232
        %512 = vmatpush1.msra.mxu0 %v231
        %513 = vmatprep.subr.mxu0 %v248
        %514 = vmatpush1.msra.mxu0 %v247
        %515 = vmatprep.subr.mxu0 0.0
        %516 = vmatpush1.msra.mxu0 0.0
        %517 = vmatprep.subr.mxu0 0.0
        %518 = vmatpush1.msra.mxu0 0.0
        %519 = vmatprep.subr.mxu0 0.0
        %520 = vmatpush1.msra.mxu0 0.0
        %521 = vmatprep.subr.mxu0 0.0
        %522 = vmatpush1.msra.mxu0 0.0
        %523 = vmatprep.subr.mxu0 0.0
        %524 = vmatpush1.msra.mxu0 0.0
        %525 = vmatprep.subr.mxu0 0.0
        %526 = vmatpush1.msra.mxu0 0.0
        %527 = vmatprep.subr.mxu0 0.0
        %528 = vmatpush1.msra.mxu0 0.0
        %529 = vmatprep.subr.mxu0 0.0
        %530 = vmatpush1.msra.mxu0 0.0
        %531 = vmatprep.subr.mxu0 0.0
        %532 = vmatpush1.msra.mxu0 0.0
        %533 = vmatprep.subr.mxu0 0.0
        %534 = vmatpush1.msra.mxu0 0.0
        %535 = vmatprep.subr.mxu0 0.0
        %536 = vmatpush1.msra.mxu0 0.0
        %537 = vmatprep.subr.mxu0 0.0
        %538 = vmatpush1.msra.mxu0 0.0
        %539 = vmatprep.subr.mxu0 0.0
        %540 = vmatpush1.msra.mxu0 0.0
        %541 = vmatprep.subr.mxu0 0.0
        %542 = vmatpush1.msra.mxu0 0.0
        %543 = vmatprep.subr.mxu0 0.0
        %544 = vmatpush1.msra.mxu0 0.0
        %545 = vmatprep.subr.mxu0 0.0
        %546 = vmatpush1.msra.mxu0 0.0
        %547 = vmatprep.subr.mxu0 0.0
        %548 = vmatpush1.msra.mxu0 0.0
        %549 = vmatprep.subr.mxu0 0.0
        %550 = vmatpush1.msra.mxu0 0.0
        %551 = vmatprep.subr.mxu0 0.0
        %552 = vmatpush1.msra.mxu0 0.0
        %553 = vmatprep.subr.mxu0 0.0
        %554 = vmatpush1.msra.mxu0 0.0
        %555 = vmatprep.subr.mxu0 0.0
        %556 = vmatpush1.msra.mxu0 0.0
        %557 = vmatprep.subr.mxu0 0.0
        %558 = vmatpush1.msra.mxu0 0.0
        %559 = vmatprep.subr.mxu0 0.0
        %560 = vmatpush1.msra.mxu0 0.0
        %561 = vmatprep.subr.mxu0 0.0
        %562 = vmatpush1.msra.mxu0 0.0
        %563 = vmatprep.subr.mxu0 0.0
        %564 = vmatpush1.msra.mxu0 0.0
        %565 = vmatprep.subr.mxu0 0.0
        %566 = vmatpush1.msra.mxu0 0.0
        %567 = vmatprep.subr.mxu0 0.0
        %568 = vmatpush1.msra.mxu0 0.0
        %569 = vmatprep.subr.mxu0 0.0
        %570 = vmatpush1.msra.mxu0 0.0
        %571 = vmatprep.mubr.f32.mxu0 0.0
        %572 = vmatmul.mubr.f32.gmra.mrb[0].mxu0 %v271
        %v573 = vpop.f32.mrb[0].mxu0
        %v574 = vadd.f32 %v262, %v573
        %v575 = vpop.f32.mrb[0].mxu0
        %v576 = vadd.f32 %v262, %v575
        %577 = vmatprep.mubr.f32.mxu0 0.0
        %578 = vmatmul.mubr.f32.gmra.mrb[0].mxu0 %v274
        %v579 = vpop.f32.mrb[0].mxu0
        %v580 = vadd.f32 %v267, %v579
        %v581 = vpop.f32.mrb[0].mxu0
        %v582 = vadd.f32 %v267, %v581
        %583 = vdwg.mxu0
        %584 = vmatprep.subr.mxu0 %v202
        %585 = vmatpush1.msra.mxu0 %v201
        %586 = vmatprep.subr.mxu0 %v218
        %587 = vmatpush1.msra.mxu0 %v217
        %588 = vmatprep.subr.mxu0 %v234
        %589 = vmatpush1.msra.mxu0 %v233
        %590 = vmatprep.subr.mxu0 %v250
        %591 = vmatpush1.msra.mxu0 %v249
        %592 = vmatprep.subr.mxu0 0.0
        %593 = vmatpush1.msra.mxu0 0.0
        %594 = vmatprep.subr.mxu0 0.0
        %595 = vmatpush1.msra.mxu0 0.0
        %596 = vmatprep.subr.mxu0 0.0
        %597 = vmatpush1.msra.mxu0 0.0
        %598 = vmatprep.subr.mxu0 0.0
        %599 = vmatpush1.msra.mxu0 0.0
        %600 = vmatprep.subr.mxu0 0.0
        %601 = vmatpush1.msra.mxu0 0.0
        %602 = vmatprep.subr.mxu0 0.0
        %603 = vmatpush1.msra.mxu0 0.0
        %604 = vmatprep.subr.mxu0 0.0
        %605 = vmatpush1.msra.mxu0 0.0
        %606 = vmatprep.subr.mxu0 0.0
        %607 = vmatpush1.msra.mxu0 0.0
        %608 = vmatprep.subr.mxu0 0.0
        %609 = vmatpush1.msra.mxu0 0.0
        %610 = vmatprep.subr.mxu0 0.0
        %611 = vmatpush1.msra.mxu0 0.0
        %612 = vmatprep.subr.mxu0 0.0
        %613 = vmatpush1.msra.mxu0 0.0
        %614 = vmatprep.subr.mxu0 0.0
        %615 = vmatpush1.msra.mxu0 0.0
        %616 = vmatprep.subr.mxu0 0.0
        %617 = vmatpush1.msra.mxu0 0.0
        %618 = vmatprep.subr.mxu0 0.0
        %619 = vmatpush1.msra.mxu0 0.0
        %620 = vmatprep.subr.mxu0 0.0
        %621 = vmatpush1.msra.mxu0 0.0
        %622 = vmatprep.subr.mxu0 0.0
        %623 = vmatpush1.msra.mxu0 0.0
        %624 = vmatprep.subr.mxu0 0.0
        %625 = vmatpush1.msra.mxu0 0.0
        %626 = vmatprep.subr.mxu0 0.0
        %627 = vmatpush1.msra.mxu0 0.0
        %628 = vmatprep.subr.mxu0 0.0
        %629 = vmatpush1.msra.mxu0 0.0
        %630 = vmatprep.subr.mxu0 0.0
        %631 = vmatpush1.msra.mxu0 0.0
        %632 = vmatprep.subr.mxu0 0.0
        %633 = vmatpush1.msra.mxu0 0.0
        %634 = vmatprep.subr.mxu0 0.0
        %635 = vmatpush1.msra.mxu0 0.0
        %636 = vmatprep.subr.mxu0 0.0
        %637 = vmatpush1.msra.mxu0 0.0
        %638 = vmatprep.subr.mxu0 0.0
        %639 = vmatpush1.msra.mxu0 0.0
        %640 = vmatprep.subr.mxu0 0.0
        %641 = vmatpush1.msra.mxu0 0.0
        %642 = vmatprep.subr.mxu0 0.0
        %643 = vmatpush1.msra.mxu0 0.0
        %644 = vmatprep.subr.mxu0 0.0
        %645 = vmatpush1.msra.mxu0 0.0
        %646 = vmatprep.subr.mxu0 0.0
        %647 = vmatpush1.msra.mxu0 0.0
        %648 = vmatprep.mubr.f32.mxu0 0.0
        %649 = vmatmul.mubr.f32.gmra.mrb[0].mxu0 %v271
        %v650 = vpop.f32.mrb[0].mxu0
        %v651 = vadd.f32 %v262, %v650
        %v652 = vpop.f32.mrb[0].mxu0
        %v653 = vadd.f32 %v262, %v652
        %654 = vmatprep.mubr.f32.mxu0 0.0
        %655 = vmatmul.mubr.f32.gmra.mrb[0].mxu0 %v274
        %v656 = vpop.f32.mrb[0].mxu0
        %v657 = vadd.f32 %v267, %v656
        %v658 = vpop.f32.mrb[0].mxu0
        %v659 = vadd.f32 %v267, %v658
        %660 = vdwg.mxu0
        %661 = vmatprep.subr.mxu0 %v204
        %662 = vmatpush1.msra.mxu0 %v203
        %663 = vmatprep.subr.mxu0 %v220
        %664 = vmatpush1.msra.mxu0 %v219
        %665 = vmatprep.subr.mxu0 %v236
        %666 = vmatpush1.msra.mxu0 %v235
        %667 = vmatprep.subr.mxu0 %v252
        %668 = vmatpush1.msra.mxu0 %v251
        %669 = vmatprep.subr.mxu0 0.0
        %670 = vmatpush1.msra.mxu0 0.0
        %671 = vmatprep.subr.mxu0 0.0
        %672 = vmatpush1.msra.mxu0 0.0
        %673 = vmatprep.subr.mxu0 0.0
        %674 = vmatpush1.msra.mxu0 0.0
        %675 = vmatprep.subr.mxu0 0.0
        %676 = vmatpush1.msra.mxu0 0.0
        %677 = vmatprep.subr.mxu0 0.0
        %678 = vmatpush1.msra.mxu0 0.0
        %679 = vmatprep.subr.mxu0 0.0
        %680 = vmatpush1.msra.mxu0 0.0
        %681 = vmatprep.subr.mxu0 0.0
        %682 = vmatpush1.msra.mxu0 0.0
        %683 = vmatprep.subr.mxu0 0.0
        %684 = vmatpush1.msra.mxu0 0.0
        %685 = vmatprep.subr.mxu0 0.0
        %686 = vmatpush1.msra.mxu0 0.0
        %687 = vmatprep.subr.mxu0 0.0
        %688 = vmatpush1.msra.mxu0 0.0
        %689 = vmatprep.subr.mxu0 0.0
        %690 = vmatpush1.msra.mxu0 0.0
        %691 = vmatprep.subr.mxu0 0.0
        %692 = vmatpush1.msra.mxu0 0.0
        %693 = vmatprep.subr.mxu0 0.0
        %694 = vmatpush1.msra.mxu0 0.0
        %695 = vmatprep.subr.mxu0 0.0
        %696 = vmatpush1.msra.mxu0 0.0
        %697 = vmatprep.subr.mxu0 0.0
        %698 = vmatpush1.msra.mxu0 0.0
        %699 = vmatprep.subr.mxu0 0.0
        %700 = vmatpush1.msra.mxu0 0.0
        %701 = vmatprep.subr.mxu0 0.0
        %702 = vmatpush1.msra.mxu0 0.0
        %703 = vmatprep.subr.mxu0 0.0
        %704 = vmatpush1.msra.mxu0 0.0
        %705 = vmatprep.subr.mxu0 0.0
        %706 = vmatpush1.msra.mxu0 0.0
        %707 = vmatprep.subr.mxu0 0.0
        %708 = vmatpush1.msra.mxu0 0.0
        %709 = vmatprep.subr.mxu0 0.0
        %710 = vmatpush1.msra.mxu0 0.0
        %711 = vmatprep.subr.mxu0 0.0
        %712 = vmatpush1.msra.mxu0 0.0
        %713 = vmatprep.subr.mxu0 0.0
        %714 = vmatpush1.msra.mxu0 0.0
        %715 = vmatprep.subr.mxu0 0.0
        %716 = vmatpush1.msra.mxu0 0.0
        %717 = vmatprep.subr.mxu0 0.0
        %718 = vmatpush1.msra.mxu0 0.0
        %719 = vmatprep.subr.mxu0 0.0
        %720 = vmatpush1.msra.mxu0 0.0
        %721 = vmatprep.subr.mxu0 0.0
        %722 = vmatpush1.msra.mxu0 0.0
        %723 = vmatprep.subr.mxu0 0.0
        %724 = vmatpush1.msra.mxu0 0.0
        %725 = vmatprep.mubr.f32.mxu0 0.0
        %726 = vmatmul.mubr.f32.gmra.mrb[0].mxu0 %v271
        %v727 = vpop.f32.mrb[0].mxu0
        %v728 = vadd.f32 %v262, %v727
        %v729 = vpop.f32.mrb[0].mxu0
        %v730 = vadd.f32 %v262, %v729
        %731 = vmatprep.mubr.f32.mxu0 0.0
        %732 = vmatmul.mubr.f32.gmra.mrb[0].mxu0 %v274
        %v733 = vpop.f32.mrb[0].mxu0
        %v734 = vadd.f32 %v267, %v733
        %v735 = vpop.f32.mrb[0].mxu0
        %v736 = vadd.f32 %v267, %v735
        %737 = vdwg.mxu0
        %738 = vmatprep.subr.mxu0 %v206
        %739 = vmatpush1.msra.mxu0 %v205
        %740 = vmatprep.subr.mxu0 %v222
        %741 = vmatpush1.msra.mxu0 %v221
        %742 = vmatprep.subr.mxu0 %v238
        %743 = vmatpush1.msra.mxu0 %v237
        %744 = vmatprep.subr.mxu0 %v254
        %745 = vmatpush1.msra.mxu0 %v253
        %746 = vmatprep.subr.mxu0 0.0
        %747 = vmatpush1.msra.mxu0 0.0
        %748 = vmatprep.subr.mxu0 0.0
        %749 = vmatpush1.msra.mxu0 0.0
        %750 = vmatprep.subr.mxu0 0.0
        %751 = vmatpush1.msra.mxu0 0.0
        %752 = vmatprep.subr.mxu0 0.0
        %753 = vmatpush1.msra.mxu0 0.0
        %754 = vmatprep.subr.mxu0 0.0
        %755 = vmatpush1.msra.mxu0 0.0
        %756 = vmatprep.subr.mxu0 0.0
        %757 = vmatpush1.msra.mxu0 0.0
        %758 = vmatprep.subr.mxu0 0.0
        %759 = vmatpush1.msra.mxu0 0.0
        %760 = vmatprep.subr.mxu0 0.0
        %761 = vmatpush1.msra.mxu0 0.0
        %762 = vmatprep.subr.mxu0 0.0
        %763 = vmatpush1.msra.mxu0 0.0
        %764 = vmatprep.subr.mxu0 0.0
        %765 = vmatpush1.msra.mxu0 0.0
        %766 = vmatprep.subr.mxu0 0.0
        %767 = vmatpush1.msra.mxu0 0.0
        %768 = vmatprep.subr.mxu0 0.0
        %769 = vmatpush1.msra.mxu0 0.0
        %770 = vmatprep.subr.mxu0 0.0
        %771 = vmatpush1.msra.mxu0 0.0
        %772 = vmatprep.subr.mxu0 0.0
        %773 = vmatpush1.msra.mxu0 0.0
        %774 = vmatprep.subr.mxu0 0.0
        %775 = vmatpush1.msra.mxu0 0.0
        %776 = vmatprep.subr.mxu0 0.0
        %777 = vmatpush1.msra.mxu0 0.0
        %778 = vmatprep.subr.mxu0 0.0
        %779 = vmatpush1.msra.mxu0 0.0
        %780 = vmatprep.subr.mxu0 0.0
        %781 = vmatpush1.msra.mxu0 0.0
        %782 = vmatprep.subr.mxu0 0.0
        %783 = vmatpush1.msra.mxu0 0.0
        %784 = vmatprep.subr.mxu0 0.0
        %785 = vmatpush1.msra.mxu0 0.0
        %786 = vmatprep.subr.mxu0 0.0
        %787 = vmatpush1.msra.mxu0 0.0
        %788 = vmatprep.subr.mxu0 0.0
        %789 = vmatpush1.msra.mxu0 0.0
        %790 = vmatprep.subr.mxu0 0.0
        %791 = vmatpush1.msra.mxu0 0.0
        %792 = vmatprep.subr.mxu0 0.0
        %793 = vmatpush1.msra.mxu0 0.0
        %794 = vmatprep.subr.mxu0 0.0
        %795 = vmatpush1.msra.mxu0 0.0
        %796 = vmatprep.subr.mxu0 0.0
        %797 = vmatpush1.msra.mxu0 0.0
        %798 = vmatprep.subr.mxu0 0.0
        %799 = vmatpush1.msra.mxu0 0.0
        %800 = vmatprep.subr.mxu0 0.0
        %801 = vmatpush1.msra.mxu0 0.0
        %802 = vmatprep.mubr.f32.mxu0 0.0
        %803 = vmatmul.mubr.f32.gmra.mrb[0].mxu0 %v271
        %v804 = vpop.f32.mrb[0].mxu0
        %v805 = vadd.f32 %v262, %v804
        %v806 = vpop.f32.mrb[0].mxu0
        %v807 = vadd.f32 %v262, %v806
        %808 = vmatprep.mubr.f32.mxu0 0.0
        %809 = vmatmul.mubr.f32.gmra.mrb[0].mxu0 %v274
        %v810 = vpop.f32.mrb[0].mxu0
        %v811 = vadd.f32 %v267, %v810
        %v812 = vpop.f32.mrb[0].mxu0
        %v813 = vadd.f32 %v267, %v812
        %814 = vdwg.mxu0
        %815 = vmatprep.subr.mxu0 %v208
        %816 = vmatpush1.msra.mxu0 %v207
        %817 = vmatprep.subr.mxu0 %v224
        %818 = vmatpush1.msra.mxu0 %v223
        %819 = vmatprep.subr.mxu0 %v240
        %820 = vmatpush1.msra.mxu0 %v239
        %821 = vmatprep.subr.mxu0 %v256
        %822 = vmatpush1.msra.mxu0 %v255
        %823 = vmatprep.subr.mxu0 0.0
        %824 = vmatpush1.msra.mxu0 0.0
        %825 = vmatprep.subr.mxu0 0.0
        %826 = vmatpush1.msra.mxu0 0.0
        %827 = vmatprep.subr.mxu0 0.0
        %828 = vmatpush1.msra.mxu0 0.0
        %829 = vmatprep.subr.mxu0 0.0
        %830 = vmatpush1.msra.mxu0 0.0
        %831 = vmatprep.subr.mxu0 0.0
        %832 = vmatpush1.msra.mxu0 0.0
        %833 = vmatprep.subr.mxu0 0.0
        %834 = vmatpush1.msra.mxu0 0.0
        %835 = vmatprep.subr.mxu0 0.0
        %836 = vmatpush1.msra.mxu0 0.0
        %837 = vmatprep.subr.mxu0 0.0
        %838 = vmatpush1.msra.mxu0 0.0
        %839 = vmatprep.subr.mxu0 0.0
        %840 = vmatpush1.msra.mxu0 0.0
        %841 = vmatprep.subr.mxu0 0.0
        %842 = vmatpush1.msra.mxu0 0.0
        %843 = vmatprep.subr.mxu0 0.0
        %844 = vmatpush1.msra.mxu0 0.0
        %845 = vmatprep.subr.mxu0 0.0
        %846 = vmatpush1.msra.mxu0 0.0
        %847 = vmatprep.subr.mxu0 0.0
        %848 = vmatpush1.msra.mxu0 0.0
        %849 = vmatprep.subr.mxu0 0.0
        %850 = vmatpush1.msra.mxu0 0.0
        %851 = vmatprep.subr.mxu0 0.0
        %852 = vmatpush1.msra.mxu0 0.0
        %853 = vmatprep.subr.mxu0 0.0
        %854 = vmatpush1.msra.mxu0 0.0
        %855 = vmatprep.subr.mxu0 0.0
        %856 = vmatpush1.msra.mxu0 0.0
        %857 = vmatprep.subr.mxu0 0.0
        %858 = vmatpush1.msra.mxu0 0.0
        %859 = vmatprep.subr.mxu0 0.0
        %860 = vmatpush1.msra.mxu0 0.0
        %861 = vmatprep.subr.mxu0 0.0
        %862 = vmatpush1.msra.mxu0 0.0
        %863 = vmatprep.subr.mxu0 0.0
        %864 = vmatpush1.msra.mxu0 0.0
        %865 = vmatprep.subr.mxu0 0.0
        %866 = vmatpush1.msra.mxu0 0.0
        %867 = vmatprep.subr.mxu0 0.0
        %868 = vmatpush1.msra.mxu0 0.0
        %869 = vmatprep.subr.mxu0 0.0
        %870 = vmatpush1.msra.mxu0 0.0
        %871 = vmatprep.subr.mxu0 0.0
        %872 = vmatpush1.msra.mxu0 0.0
        %873 = vmatprep.subr.mxu0 0.0
        %874 = vmatpush1.msra.mxu0 0.0
        %875 = vmatprep.subr.mxu0 0.0
        %876 = vmatpush1.msra.mxu0 0.0
        %877 = vmatprep.subr.mxu0 0.0
        %878 = vmatpush1.msra.mxu0 0.0
        %879 = vmatprep.mubr.f32.mxu0 0.0
        %880 = vmatmul.mubr.f32.gmra.mrb[0].mxu0 %v271
        %v881 = vpop.f32.mrb[0].mxu0
        %v882 = vadd.f32 %v262, %v881
        %v883 = vpop.f32.mrb[0].mxu0
        %v884 = vadd.f32 %v262, %v883
        %885 = vmatprep.mubr.f32.mxu0 0.0
        %886 = vmatmul.mubr.f32.gmra.mrb[0].mxu0 %v274
        %v887 = vpop.f32.mrb[0].mxu0
        %v888 = vadd.f32 %v267, %v887
        %v889 = vpop.f32.mrb[0].mxu0
        %v890 = vadd.f32 %v267, %v889
        %891 = vdwg.mxu0
        %v892 = vmax.f32 %v343, 0.0
        %v893 = vmax.f32 %v345, 0.0
        %v894 = vmax.f32 %v420, 0.0
        %v895 = vmax.f32 %v422, 0.0
        %v896 = vmax.f32 %v497, 0.0
        %v897 = vmax.f32 %v499, 0.0
        %v898 = vmax.f32 %v574, 0.0
        %v899 = vmax.f32 %v576, 0.0
        %v900 = vmax.f32 %v651, 0.0
        %v901 = vmax.f32 %v653, 0.0
        %v902 = vmax.f32 %v728, 0.0
        %v903 = vmax.f32 %v730, 0.0
        %v904 = vmax.f32 %v805, 0.0
        %v905 = vmax.f32 %v807, 0.0
        %v906 = vmax.f32 %v882, 0.0
        %v907 = vmax.f32 %v884, 0.0
        %v908 = vmax.f32 %v349, 0.0
        %v909 = vmax.f32 %v351, 0.0
        %v910 = vmax.f32 %v426, 0.0
        %v911 = vmax.f32 %v428, 0.0
        %v912 = vmax.f32 %v503, 0.0
        %v913 = vmax.f32 %v505, 0.0
        %v914 = vmax.f32 %v580, 0.0
        %v915 = vmax.f32 %v582, 0.0
        %v916 = vmax.f32 %v657, 0.0
        %v917 = vmax.f32 %v659, 0.0
        %v918 = vmax.f32 %v734, 0.0
        %v919 = vmax.f32 %v736, 0.0
        %v920 = vmax.f32 %v811, 0.0
        %v921 = vmax.f32 %v813, 0.0
        %v922 = vmax.f32 %v888, 0.0
        %v923 = vmax.f32 %v890, 0.0
        %924 = vst [vmem:[%s188] sm:$0xff] %v892
        %925 = vst [vmem:[%s188 + $0x8] sm:$0xff] %v893
        %926 = vst [vmem:[%s188 + $0x10] sm:$0xff] %v894
        %927 = vst [vmem:[%s188 + $0x18] sm:$0xff] %v895
        %928 = vst [vmem:[%s188 + $0x20] sm:$0xff] %v896
        %929 = vst [vmem:[%s188 + $0x28] sm:$0xff] %v897
        %930 = vst [vmem:[%s188 + $0x30] sm:$0xff] %v898
        %931 = vst [vmem:[%s188 + $0x38] sm:$0xff] %v899
        %932 = vst [vmem:[%s188 + $0x40] sm:$0xff] %v900
        %933 = vst [vmem:[%s188 + $0x48] sm:$0xff] %v901
        %934 = vst [vmem:[%s188 + $0x50] sm:$0xff] %v902
        %935 = vst [vmem:[%s188 + $0x58] sm:$0xff] %v903
        %936 = vst [vmem:[%s188 + $0x60] sm:$0xff] %v904
        %937 = vst [vmem:[%s188 + $0x68] sm:$0xff] %v905
        %938 = vst [vmem:[%s188 + $0x70] sm:$0xff] %v906
        %939 = vst [vmem:[%s188 + $0x78] sm:$0xff] %v907
        %940 = vst [vmem:[%s188 + $0x80] sm:$0xff] %v908
        %941 = vst [vmem:[%s188 + $0x88] sm:$0xff] %v909
        %942 = vst [vmem:[%s188 + $0x90] sm:$0xff] %v910
        %943 = vst [vmem:[%s188 + $0x98] sm:$0xff] %v911
        %944 = vst [vmem:[%s188 + $0xa0] sm:$0xff] %v912
        %945 = vst [vmem:[%s188 + $0xa8] sm:$0xff] %v913
        %946 = vst [vmem:[%s188 + $0xb0] sm:$0xff] %v914
        %947 = vst [vmem:[%s188 + $0xb8] sm:$0xff] %v915
        %948 = vst [vmem:[%s188 + $0xc0] sm:$0xff] %v916
        %949 = vst [vmem:[%s188 + $0xc8] sm:$0xff] %v917
        %950 = vst [vmem:[%s188 + $0xd0] sm:$0xff] %v918
        %951 = vst [vmem:[%s188 + $0xd8] sm:$0xff] %v919
        %952 = vst [vmem:[%s188 + $0xe0] sm:$0xff] %v920
        %953 = vst [vmem:[%s188 + $0xe8] sm:$0xff] %v921
        %954 = vst [vmem:[%s188 + $0xf0] sm:$0xff] %v922
        %955 = vst [vmem:[%s188 + $0xf8] sm:$0xff] %v923
        %s956 = sand.u32 %s96, 1
        %s957 = scalar_lea.sflag [#allocation4], %s956
        %s958 = sand.u32 %s96, 1
        %s959 = smul.addr %s958, 256
        %s960 = scalar_lea.vmem [#allocation5], %s959
        // Predicated region
        $region37: #{tpu_custom_call.1} parent=31 // pred_check
          %p961 = pneg %p106
        $region38: #{tpu_custom_call.1} parent=31 // pred_check_branch
          %963 = sbr.rel (%p961) target = $region40
        $region39: #{tpu_custom_call.1} parent=31 // pred_region
          %s964 = smul.u32 16, %s20
          %s966 = ssub.s32 4096, 4096
          %967 = vsyncadd %s957, %s966
          %s968 = smul.addr %s964, 128
          %s969 = scalar_lea.hbm %s3, %s968
          %s970 = sshll.u32 %s960, 4
          %s971 = int_to_ptr.vmem [resolvable:$true] %s970
          %976 = dma.vmem_to_hbm [thread:$0]  %s971, 4096, %s969, %s957, 2048, 8192, 128
        $region40: #{tpu_custom_call.1} parent=31 // pred_fallthru
          _
      $region32: #{tpu_custom_call.1} parent=5 // pred_fallthru
        _
      %p977 = scmp.le.s32.totalorder 2, %s15
      // Predicated region
      $region41: #{tpu_custom_call.1} parent=5 // pred_check
        %p978 = pneg %p977
      $region42: #{tpu_custom_call.1} parent=5 // pred_check_branch
        %980 = sbr.rel (%p978) target = $region44
      $region43: #{tpu_custom_call.1} parent=5 // pred_region
        %s981 = ssub.s32 %s15, 2
        // Predicated region
        $region45: #{tpu_custom_call.1} parent=43 // pred_check
          %p982 = pneg %p112
        $region46: #{tpu_custom_call.1} parent=43 // pred_check_branch
          %984 = sbr.rel (%p982) target = $region48
        $region47: #{tpu_custom_call.1} parent=43 // pred_region
          %s985 = sand.u32 %s97, 1
          %s986 = scalar_lea.sflag [#allocation4], %s985
          %s987 = sand.u32 %s97, 1
          %s988 = smul.addr %s987, 256
          %s989 = scalar_lea.vmem [#allocation5], %s988
          %990 = dma.done %s986, 4096
        $region48: #{tpu_custom_call.1} parent=43 // pred_fallthru
          _
      $region44: #{tpu_custom_call.1} parent=5 // pred_fallthru
        _
    $region6: #{tpu_custom_call.1} parent=1 // loop_footer
      %s19 = sadd.s32 1, %s15
    $region7: #{tpu_custom_call.1} parent=1 // loop_footer_branch
      %14 = sbr.rel target = $region3
    $region8: #{tpu_custom_call.1} parent=1 // loop_exit
      _
    %991 = vsyncpa [#allocation3], 1
    %s992 = scalar_lea.sflag [#allocation3], 1
    %993 = vsyncpa %s992, 1
    %994 = vsyncpa [#allocation4], 1
    %s995 = scalar_lea.sflag [#allocation4], 1
    %996 = vsyncpa %s995, 1

</llo_original>
